<compile_context>
chip_gen: v5e
topology: v5e:2x2
jax: 0.10.0
libtpu: 0.0.40
codegen_flags: <defaults>
</compile_context>

<pallas_src>
import functools

import jax
import jax.numpy as jnp
from jax import lax
from jax.experimental import pallas as pl
from jax.experimental.pallas import tpu as pltpu

DICE_EPS = 1e-7  # smp DiceLoss default eps (smooth = 0.0, log_loss = False)
LANE = 128


def _partials_kernel(x_ref, t_ref, out_ref, *, total_pixels, needs_mask):
    """Per-block partial sums.

    x_ref:   (C, TM, 128) logits block (native dtype, cast to f32 here)
    t_ref:   (TM, 128)    int32 labels (value == C marks a padded pixel)
    out_ref: (1, 3*C + 2, 128) f32 partials:
             rows [0:C)      per-class sum(probs * onehot)      (dice intersection)
             rows [C:2C)     per-class sum(probs)               (dice cardinality part)
             rows [2C:3C)    per-class sum(onehot)              (dice target count)
             row  3C         sum over pixels of -log_softmax[target]
             row  3C+1       sum over pixels of -sum_c log_softmax_c
    """
    c_classes, tm, lane = x_ref.shape
    x = x_ref[...].astype(jnp.float32)          # (C, TM, L)
    t = t_ref[...]                              # (TM, L) int32

    # Stable softmax over the (small, leading) class axis: pure VPU elementwise.
    m = jnp.max(x, axis=0)                      # (TM, L)
    z = x - m[None]                             # (C, TM, L)
    e = jnp.exp(z)                              # EUP
    s = jnp.sum(e, axis=0)                      # (TM, L)
    inv_s = pl.reciprocal(s)                    # one reciprocal per pixel
    log_s = jnp.log(s)                          # (TM, L)
    z_sum = jnp.sum(z, axis=0)                  # (TM, L)

    if needs_mask:
        rows = lax.broadcasted_iota(jnp.int32, (tm, lane), 0)
        cols = lax.broadcasted_iota(jnp.int32, (tm, lane), 1)
        pix = pl.program_id(0) * (tm * lane) + rows * lane + cols
        valid = pix < total_pixels
    else:
        valid = None

    inter_rows, sump_rows, tsum_rows = [], [], []
    z_at_tgt = jnp.zeros((tm, lane), jnp.float32)
    # TODO(synk): labels outside [0, C) behave like "no class" (no ignore_index
    # renormalization), matching the original assumption of in-range targets.
    for c in range(c_classes):                  # unrolled: C is small & static
        mask_c = (t == c)                       # bool, no f32 one-hot tensor
        maskf = mask_c.astype(jnp.float32)
        probs_c = e[c] * inv_s                  # (TM, L)
        inter_tile = probs_c * maskf            # padded pixels: maskf == 0
        if needs_mask:
            probs_c = jnp.where(valid, probs_c, 0.0)
        inter_rows.append(jnp.sum(inter_tile, axis=0, keepdims=True))
        sump_rows.append(jnp.sum(probs_c, axis=0, keepdims=True))
        tsum_rows.append(jnp.sum(maskf, axis=0, keepdims=True))
        z_at_tgt = z_at_tgt + jnp.where(mask_c, z[c], 0.0)

    nll_tile = log_s - z_at_tgt                 # -log_softmax[target]
    smooth_tile = c_classes * log_s - z_sum     # -sum_c log_softmax_c
    if needs_mask:
        nll_tile = jnp.where(valid, nll_tile, 0.0)
        smooth_tile = jnp.where(valid, smooth_tile, 0.0)

    all_rows = inter_rows + sump_rows + tsum_rows
    all_rows.append(jnp.sum(nll_tile, axis=0, keepdims=True))
    all_rows.append(jnp.sum(smooth_tile, axis=0, keepdims=True))
    block = jnp.concatenate(all_rows, axis=0)   # (3C+2, L), lane-dense
    out_ref[...] = block.reshape(1, *block.shape)


def joint_loss(logits, target, *, dice_loss_weight=0.5, ce_loss_weight=0.5,
               smooth_factor=0.1, block_rows=1024):
    """logits: (N, C, H, W) float (f32 or bf16); target: (N, H, W) ints in [0, C)."""
    n, c, h, w = logits.shape
    npix = n * h * w

    # Class-major, spatially flattened layout (wrapper-side layout plumbing).
    x = jnp.transpose(logits.reshape(n, c, h * w), (1, 0, 2)).reshape(c, npix)
    t = target.reshape(npix).astype(jnp.int32)
    # NOTE: target stays int32; narrower (int8) labels would shave bytes but
    # complicate packed-dtype block tiling for small blocks.

    m_rows = pl.cdiv(npix, LANE)
    itemsize = jnp.dtype(logits.dtype).itemsize
    grain = max(8, 32 // itemsize)              # sublane granularity (f32:8, bf16:16)
    if m_rows <= block_rows:
        tm = m_rows                             # single block == full dim (always legal)
    else:
        tm = max(grain, (block_rows // grain) * grain)
    m_pad = pl.cdiv(m_rows, tm) * tm
    total_pad = m_pad * LANE - npix
    if total_pad:
        x = jnp.pad(x, ((0, 0), (0, total_pad)))                       # zeros: finite softmax
        t = jnp.pad(t, ((0, total_pad),), constant_values=c)           # out-of-range sentinel
    x = x.reshape(c, m_pad, LANE)
    t = t.reshape(m_pad, LANE)

    grid = (m_pad // tm,)
    stats = 3 * c + 2
    kernel = functools.partial(_partials_kernel,
                               total_pixels=npix,
                               needs_mask=bool(total_pad))

    parts = pl.pallas_call(
        kernel,
        out_shape=jax.ShapeDtypeStruct((grid[0], stats, LANE), jnp.float32),
        grid=grid,
        in_specs=[
            pl.BlockSpec((c, tm, LANE), lambda i: (0, i, 0)),
            pl.BlockSpec((tm, LANE), lambda i: (i, 0)),
        ],
        out_specs=pl.BlockSpec((1, stats, LANE), lambda i: (i, 0, 0)),
        compiler_params=pltpu.CompilerParams(
            dimension_semantics=("parallel",),       # independent blocks -> megacore-friendly
            vmem_limit_bytes=32 * 1024 * 1024,
        ),
    )(x, t)

    # Tiny epilogue on the partial sums (pure JAX).
    sums = jnp.sum(parts, axis=(0, 2))          # (3C+2,)
    inter = sums[:c]
    sump = sums[c:2 * c]
    tsum = sums[2 * c:3 * c]
    nll_sum = sums[3 * c]
    smooth_sum = sums[3 * c + 1]

    card = sump + tsum                          # sum(probs) + sum(onehot)
    score = 2.0 * inter / jnp.maximum(card, DICE_EPS)
    dice_loss = jnp.mean((1.0 - score) * (tsum > 0.0))

    denom = float(npix)
    ce_loss = ((1.0 - smooth_factor) * (nll_sum / denom)
               + (smooth_factor / c) * (smooth_sum / denom))
    return dice_loss_weight * dice_loss + ce_loss_weight * ce_loss


def _joint_loss_reference(logits, target, *, dice_loss_weight=0.5,
                          ce_loss_weight=0.5, smooth_factor=0.1):
    """Pure-JAX reference mirroring smp DiceLoss + SoftCrossEntropyLoss."""
    n, c, h, w = logits.shape
    x = logits.reshape(n, c, -1).astype(jnp.float32)
    t = target.reshape(n, -1).astype(jnp.int32)
    lsm = jax.nn.log_softmax(x, axis=1)
    probs = jnp.exp(lsm)
    onehot = jax.nn.one_hot(t, c, axis=1, dtype=jnp.float32)
    inter = jnp.sum(probs * onehot, axis=(0, 2))
    card = jnp.sum(probs + onehot, axis=(0, 2))
    tsum = jnp.sum(onehot, axis=(0, 2))
    score = 2.0 * inter / jnp.maximum(card, DICE_EPS)
    dice = jnp.mean((1.0 - score) * (tsum > 0))
    nll = -jnp.take_along_axis(lsm, t[:, None, :], axis=1)[:, 0, :]
    smooth = -jnp.sum(lsm, axis=1)
    ce = (1.0 - smooth_factor) * jnp.mean(nll) + (smooth_factor / c) * jnp.mean(smooth)
    return dice_loss_weight * dice + ce_loss_weight * ce


if __name__ == "__main__":
    key = jax.random.PRNGKey(0)
    k1, k2, k3, k4 = jax.random.split(key, 4)

    # Test 1: multi-step grid (2 blocks, no padding). classes=2 as in the module.
    N, C, H, W = 2, 2, 32, 32
    logits = jax.random.normal(k1, (N, C, H, W), dtype=jnp.float32)
    target = jax.random.randint(k2, (N, H, W), 0, C, dtype=jnp.int32)
    out = jax.block_until_ready(joint_loss(logits, target, block_rows=8))
    ref = _joint_loss_reference(logits, target)
    assert jnp.allclose(out, ref, rtol=1e-5, atol=1e-5), (out, ref)

    # Test 2: ragged size exercising the padded-block mask path (M=12 rows, TM=8).
    N2, C2, H2, W2 = 2, 2, 16, 48
    logits2 = jax.random.normal(k3, (N2, C2, H2, W2), dtype=jnp.float32)
    target2 = jax.random.randint(k4, (N2, H2, W2), 0, C2, dtype=jnp.int32)
    out2 = jax.block_until_ready(joint_loss(logits2, target2, block_rows=8))
    ref2 = _joint_loss_reference(logits2, target2)
    assert jnp.allclose(out2, ref2, rtol=1e-5, atol=1e-5), (out2, ref2)

    # Test 3: bf16 logits fed directly (no host upcast); cast happens in-kernel.
    logits_bf16 = logits.astype(jnp.bfloat16)
    out3 = jax.block_until_ready(joint_loss(logits_bf16, target))
    ref3 = _joint_loss_reference(logits_bf16.astype(jnp.float32), target)
    assert jnp.allclose(out3, ref3, rtol=1e-4, atol=1e-4), (out3, ref3)

    print("KERNEL_OK")
</pallas_src>

<mosaic_0001>
module attributes {stable_mosaic.version = 11 : i64} {
  func.func @_partials_kernel(%arg0: i32, %arg1: memref<2x8x128xf32, #tpu.memory_space<vmem>>, %arg2: memref<8x128xi32, #tpu.memory_space<vmem>>, %arg3: memref<1x8x128xf32, #tpu.memory_space<vmem>>) attributes {dimension_semantics = [#tpu.dimension_semantics<parallel>], iteration_bounds = array<i64: 2>, scalar_prefetch = 0 : i64, scratch_operands = 0 : i64, tpu.core_type = #tpu.core_type<tc>, window_params = [{transform_indices = @transform_0, window_bounds = array<i64: 2, 8, 128>}, {transform_indices = @transform_1, window_bounds = array<i64: 8, 128>}, {transform_indices = @transform_2, window_bounds = array<i64: 1, 8, 128>}]} {
    %c0 = arith.constant 0 : index
    %c0_0 = arith.constant 0 : index
    %c0_1 = arith.constant 0 : index
    %0 = vector.load %arg1[%c0, %c0_0, %c0_1] : memref<2x8x128xf32, #tpu.memory_space<vmem>>, vector<2x8x128xf32>
    %c0_2 = arith.constant 0 : index
    %c0_3 = arith.constant 0 : index
    %1 = vector.load %arg2[%c0_2, %c0_3] : memref<8x128xi32, #tpu.memory_space<vmem>>, vector<8x128xi32>
    %cst = arith.constant dense<0xFF800000> : vector<8x128xf32>
    %2 = vector.multi_reduction <maximumf>, %0, %cst [0] : vector<2x8x128xf32> to vector<8x128xf32>
    %3 = vector.shape_cast %2 : vector<8x128xf32> to vector<1x8x128xf32>
    %4 = vector.broadcast %3 : vector<1x8x128xf32> to vector<2x8x128xf32>
    %5 = arith.subf %0, %4 : vector<2x8x128xf32>
    %6 = math.exp %5 : vector<2x8x128xf32>
    %cst_4 = arith.constant dense<0.000000e+00> : vector<8x128xf32>
    %7 = vector.multi_reduction <add>, %6, %cst_4 [0] : vector<2x8x128xf32> to vector<8x128xf32>
    %8 = tpu.reciprocal %7 : vector<8x128xf32> -> vector<8x128xf32>
    %9 = math.log %7 : vector<8x128xf32>
    %cst_5 = arith.constant dense<0.000000e+00> : vector<8x128xf32>
    %10 = vector.multi_reduction <add>, %5, %cst_5 [0] : vector<2x8x128xf32> to vector<8x128xf32>
    %cst_6 = arith.constant 0.000000e+00 : f32
    %11 = vector.broadcast %cst_6 : f32 to vector<8x128xf32>
    %c0_i32 = arith.constant 0 : i32
    %12 = vector.broadcast %c0_i32 : i32 to vector<8x128xi32>
    %13 = arith.cmpi eq, %1, %12 : vector<8x128xi32>
    %14 = arith.extui %13 : vector<8x128xi1> to vector<8x128xi32>
    %15 = arith.sitofp %14 : vector<8x128xi32> to vector<8x128xf32>
    %16 = vector.extract_strided_slice %6 {offsets = [0, 0, 0], sizes = [1, 8, 128], strides = [1, 1, 1]} : vector<2x8x128xf32> to vector<1x8x128xf32>
    %17 = vector.shape_cast %16 : vector<1x8x128xf32> to vector<8x128xf32>
    %18 = arith.mulf %17, %8 : vector<8x128xf32>
    %19 = arith.mulf %18, %15 : vector<8x128xf32>
    %cst_7 = arith.constant dense<0.000000e+00> : vector<128xf32>
    %20 = vector.multi_reduction <add>, %19, %cst_7 [0] : vector<8x128xf32> to vector<128xf32>
    %21 = vector.shape_cast %20 : vector<128xf32> to vector<1x128xf32>
    %cst_8 = arith.constant dense<0.000000e+00> : vector<128xf32>
    %22 = vector.multi_reduction <add>, %18, %cst_8 [0] : vector<8x128xf32> to vector<128xf32>
    %23 = vector.shape_cast %22 : vector<128xf32> to vector<1x128xf32>
    %cst_9 = arith.constant dense<0.000000e+00> : vector<128xf32>
    %24 = vector.multi_reduction <add>, %15, %cst_9 [0] : vector<8x128xf32> to vector<128xf32>
    %25 = vector.shape_cast %24 : vector<128xf32> to vector<1x128xf32>
    %26 = vector.extract_strided_slice %5 {offsets = [0, 0, 0], sizes = [1, 8, 128], strides = [1, 1, 1]} : vector<2x8x128xf32> to vector<1x8x128xf32>
    %27 = vector.shape_cast %26 : vector<1x8x128xf32> to vector<8x128xf32>
    %cst_10 = arith.constant 0.000000e+00 : f32
    %28 = vector.broadcast %cst_10 : f32 to vector<8x128xf32>
    %29 = arith.select %13, %27, %28 : vector<8x128xi1>, vector<8x128xf32>
    %30 = arith.addf %11, %29 : vector<8x128xf32>
    %c1_i32 = arith.constant 1 : i32
    %31 = vector.broadcast %c1_i32 : i32 to vector<8x128xi32>
    %32 = arith.cmpi eq, %1, %31 : vector<8x128xi32>
    %33 = arith.extui %32 : vector<8x128xi1> to vector<8x128xi32>
    %34 = arith.sitofp %33 : vector<8x128xi32> to vector<8x128xf32>
    %35 = vector.extract_strided_slice %6 {offsets = [1, 0, 0], sizes = [1, 8, 128], strides = [1, 1, 1]} : vector<2x8x128xf32> to vector<1x8x128xf32>
    %36 = vector.shape_cast %35 : vector<1x8x128xf32> to vector<8x128xf32>
    %37 = arith.mulf %36, %8 : vector<8x128xf32>
    %38 = arith.mulf %37, %34 : vector<8x128xf32>
    %cst_11 = arith.constant dense<0.000000e+00> : vector<128xf32>
    %39 = vector.multi_reduction <add>, %38, %cst_11 [0] : vector<8x128xf32> to vector<128xf32>
    %40 = vector.shape_cast %39 : vector<128xf32> to vector<1x128xf32>
    %cst_12 = arith.constant dense<0.000000e+00> : vector<128xf32>
    %41 = vector.multi_reduction <add>, %37, %cst_12 [0] : vector<8x128xf32> to vector<128xf32>
    %42 = vector.shape_cast %41 : vector<128xf32> to vector<1x128xf32>
    %cst_13 = arith.constant dense<0.000000e+00> : vector<128xf32>
    %43 = vector.multi_reduction <add>, %34, %cst_13 [0] : vector<8x128xf32> to vector<128xf32>
    %44 = vector.shape_cast %43 : vector<128xf32> to vector<1x128xf32>
    %45 = vector.extract_strided_slice %5 {offsets = [1, 0, 0], sizes = [1, 8, 128], strides = [1, 1, 1]} : vector<2x8x128xf32> to vector<1x8x128xf32>
    %46 = vector.shape_cast %45 : vector<1x8x128xf32> to vector<8x128xf32>
    %cst_14 = arith.constant 0.000000e+00 : f32
    %47 = vector.broadcast %cst_14 : f32 to vector<8x128xf32>
    %48 = arith.select %32, %46, %47 : vector<8x128xi1>, vector<8x128xf32>
    %49 = arith.addf %30, %48 : vector<8x128xf32>
    %50 = arith.subf %9, %49 : vector<8x128xf32>
    %cst_15 = arith.constant 2.000000e+00 : f32
    %51 = vector.broadcast %cst_15 : f32 to vector<8x128xf32>
    %52 = arith.mulf %51, %9 : vector<8x128xf32>
    %53 = arith.subf %52, %10 : vector<8x128xf32>
    %cst_16 = arith.constant dense<0.000000e+00> : vector<128xf32>
    %54 = vector.multi_reduction <add>, %50, %cst_16 [0] : vector<8x128xf32> to vector<128xf32>
    %55 = vector.shape_cast %54 : vector<128xf32> to vector<1x128xf32>
    %cst_17 = arith.constant dense<0.000000e+00> : vector<128xf32>
    %56 = vector.multi_reduction <add>, %53, %cst_17 [0] : vector<8x128xf32> to vector<128xf32>
    %57 = vector.shape_cast %56 : vector<128xf32> to vector<1x128xf32>
    %58 = tpu.concatenate %21, %40, %23, %42, %25, %44, %55, %57 in 0 : vector<1x128xf32>, vector<1x128xf32>, vector<1x128xf32>, vector<1x128xf32>, vector<1x128xf32>, vector<1x128xf32>, vector<1x128xf32>, vector<1x128xf32> -> vector<8x128xf32>
    %59 = vector.shape_cast %58 : vector<8x128xf32> to vector<1x8x128xf32>
    %c0_18 = arith.constant 0 : index
    %c0_19 = arith.constant 0 : index
    %c0_20 = arith.constant 0 : index
    %60 = vector.load %arg3[%c0_18, %c0_19, %c0_20] : memref<1x8x128xf32, #tpu.memory_space<vmem>>, vector<1x8x128xf32>
    tpu.vector_store %arg3[%c0_18, %c0_19, %c0_20], %59 {strides = array<i32>} : memref<1x8x128xf32, #tpu.memory_space<vmem>>, vector<1x8x128xf32>,
    return
  }
  func.func @transform_0(%arg0: i32) -> (i32, i32, i32) {
    %c0_i32 = arith.constant 0 : i32
    %c0_i32_0 = arith.constant 0 : i32
    %c0_i32_1 = arith.constant 0 : i32
    return %c0_i32, %arg0, %c0_i32_0 : i32, i32, i32
  }
  func.func @transform_1(%arg0: i32) -> (i32, i32) {
    %c0_i32 = arith.constant 0 : i32
    %c0_i32_0 = arith.constant 0 : i32
    return %arg0, %c0_i32 : i32, i32
  }
  func.func @transform_2(%arg0: i32) -> (i32, i32, i32) {
    %c0_i32 = arith.constant 0 : i32
    %c0_i32_0 = arith.constant 0 : i32
    %c0_i32_1 = arith.constant 0 : i32
    return %arg0, %c0_i32, %c0_i32_0 : i32, i32, i32
  }
}

</mosaic_0001>

<llo_original>
// kernel: tpu_custom_call.1
$region0: #{tpu_custom_call.1}
  #allocation0 [shape = 'u32[]', space=smem, size = 0x4, offset = 0x4, fixed_abs, tag = 'smem constant byte address 0x4 - core index']
  #allocation1 [shape = 'u32[72,128]{1,0:T(1,128)}', space=vmem, size = 0x9000, scoped, tag = 'internal scratch']
  %s0 = inlined_call_operand.hbm [shape: f32[2,16,128], index: 0, kind: input, shape index: {}]
  %s1 = inlined_call_operand.hbm [shape: s32[16,128], index: 1, kind: input, shape index: {}]
  %s2 = inlined_call_operand.hbm [shape: f32[2,8,128], index: 2, kind: output, shape index: {}]
  %s3 = sld [smem:[#allocation0]]
  $region49: #{tpu_custom_call.1} parent=0
    _
  %s5 = ssub.s32 1, %s3
  %s6 = scalar_select 0, %s5, %s3
  $region1: #{tpu_custom_call.1} parent=0
    #allocation2 [shape = 'u8[16384]{0}', space=vmem, size = 0x4000, scoped, tag = 'input window, operand 0']
    #allocation3 [shape = 's32[2]{0}', space=sflag, size = 0x8, scoped, tag = 'scoped memory for tpu_custom_call.1']
    #allocation4 [shape = 's32[2]{0}', space=sflag, size = 0x8, scoped, tag = 'scoped memory for tpu_custom_call.1']
    #allocation5 [shape = 'u8[8192]{0}', space=vmem, size = 0x2000, scoped, tag = 'input window, operand 1']
    #allocation6 [shape = 's32[2]{0}', space=sflag, size = 0x8, scoped, tag = 'scoped memory for tpu_custom_call.1']
    #allocation7 [shape = 'u8[8192]{0}', space=vmem, size = 0x2000, scoped, tag = 'output window, operand 0']
    %7 = vsyncpa [#allocation3], 0
    %s8 = scalar_lea.sflag [#allocation3], 1
    %9 = vsyncpa %s8, 0
    %10 = vsyncpa [#allocation6], 0
    %s11 = scalar_lea.sflag [#allocation6], 1
    %12 = vsyncpa %s11, 0
    %13 = vsyncpa [#allocation4], 0
    %s14 = scalar_lea.sflag [#allocation4], 1
    %15 = vsyncpa %s14, 0
    loop: start=0, step=1, limit=4
    $region2: #{tpu_custom_call.1} parent=1 // loop_pre_header
      _
    $region3: #{tpu_custom_call.1} parent=1 // loop_header
      %s17 = sphi 0, %s21
      %p18 = scmp.ge.s32.totalorder %s17, 4
      %s27 = sphi 0, %s29
      %s30 = sphi 0, %s27
      %s31 = sphi 0, %s30
      %s47 = sphi 0, %s31
      %s53 = sphi 0, %s55
      %s56 = sphi 0, %s53
      %s57 = sphi 0, %s56
      %s73 = sphi 0, %s57
      %s79 = sphi 0, %s81
      %s82 = sphi 0, %s79
      %s83 = sphi 0, %s82
      %s99 = sphi 0, %s83
    $region4: #{tpu_custom_call.1} parent=1 // loop_header_branch
      %20 = sbr.rel (%p18) target = $region8
    $region5: #{tpu_custom_call.1} parent=1 // loop_body
      %s22 = ssub.s32 %s17, 1
      %s23 = ssub.s32 %s17, 2
      %s24 = sadd.s32 %s17, 1
      %s25 = ssub.s32 %s17, %s24
      %p26 = scmp.eq.s32.totalorder %s25, 0
      %s28 = sadd.s32 %s27, 1
      %s29 = scalar_select %p26, %s27, %s28
      %p32 = pneg %p26
      %p33 = scmp.eq.s32.totalorder %s17, 1
      %p34 = por %p32, %p33
      %p35 = scmp.ne.s32.totalorder %s27, %s30
      %p36 = scmp.eq.s32.totalorder %s17, 0
      %p37 = por %p35, %p36
      %p38 = scmp.ne.s32.totalorder %s27, %s30
      %p39 = scmp.eq.s32.totalorder %s22, 1
      %p40 = por %p38, %p39
      %p41 = scmp.ne.s32.totalorder %s30, %s31
      %p42 = scmp.eq.s32.totalorder %s22, 0
      %p43 = por %p41, %p42
      %p44 = scmp.ne.s32.totalorder %s30, %s31
      %p45 = scmp.eq.s32.totalorder %s23, 1
      %p46 = por %p44, %p45
      %p48 = scmp.ne.s32.totalorder %s31, %s47
      %p49 = scmp.eq.s32.totalorder %s23, 0
      %p50 = por %p48, %p49
      %s51 = ssub.s32 %s17, %s24
      %p52 = scmp.eq.s32.totalorder %s51, 0
      %s54 = sadd.s32 %s53, 1
      %s55 = scalar_select %p52, %s53, %s54
      %p58 = pneg %p52
      %p59 = scmp.eq.s32.totalorder %s17, 1
      %p60 = por %p58, %p59
      %p61 = scmp.ne.s32.totalorder %s53, %s56
      %p62 = scmp.eq.s32.totalorder %s17, 0
      %p63 = por %p61, %p62
      %p64 = scmp.ne.s32.totalorder %s53, %s56
      %p65 = scmp.eq.s32.totalorder %s22, 1
      %p66 = por %p64, %p65
      %p67 = scmp.ne.s32.totalorder %s56, %s57
      %p68 = scmp.eq.s32.totalorder %s22, 0
      %p69 = por %p67, %p68
      %p70 = scmp.ne.s32.totalorder %s56, %s57
      %p71 = scmp.eq.s32.totalorder %s23, 1
      %p72 = por %p70, %p71
      %p74 = scmp.ne.s32.totalorder %s57, %s73
      %p75 = scmp.eq.s32.totalorder %s23, 0
      %p76 = por %p74, %p75
      %s77 = ssub.s32 %s17, %s24
      %p78 = scmp.eq.s32.totalorder %s77, 0
      %s80 = sadd.s32 %s79, 1
      %s81 = scalar_select %p78, %s79, %s80
      %p84 = pneg %p78
      %p85 = scmp.eq.s32.totalorder %s17, 1
      %p86 = por %p84, %p85
      %p87 = scmp.ne.s32.totalorder %s79, %s82
      %p88 = scmp.eq.s32.totalorder %s17, 0
      %p89 = por %p87, %p88
      %p90 = scmp.ne.s32.totalorder %s79, %s82
      %p91 = scmp.eq.s32.totalorder %s22, 1
      %p92 = por %p90, %p91
      %p93 = scmp.ne.s32.totalorder %s82, %s83
      %p94 = scmp.eq.s32.totalorder %s22, 0
      %p95 = por %p93, %p94
      %p96 = scmp.ne.s32.totalorder %s82, %s83
      %p97 = scmp.eq.s32.totalorder %s23, 1
      %p98 = por %p96, %p97
      %p100 = scmp.ne.s32.totalorder %s83, %s99
      %p101 = scmp.eq.s32.totalorder %s23, 0
      %p102 = por %p100, %p101
      %p103 = scmp.le.s32.totalorder 1, %s17
      %p104 = scmp.lt.s32.totalorder %s17, 3
      %p105 = pnand %p103, %p104
      %p106 = pneg %p105
      // Predicated region
      $region9: #{tpu_custom_call.1} parent=5 // pred_check
        _
      $region10: #{tpu_custom_call.1} parent=5 // pred_check_branch
        %108 = sbr.rel (%p105) target = $region12
      $region11: #{tpu_custom_call.1} parent=5 // pred_region
        %s109 = ssub.s32 %s17, 1
      $region12: #{tpu_custom_call.1} parent=5 // pred_fallthru
        _
      %p110 = scmp.lt.s32.totalorder %s17, 2
      // Predicated region
      $region13: #{tpu_custom_call.1} parent=5 // pred_check
        %p111 = pneg %p110
      $region14: #{tpu_custom_call.1} parent=5 // pred_check_branch
        %113 = sbr.rel (%p111) target = $region16
      $region15: #{tpu_custom_call.1} parent=5 // pred_region
        // Predicated region
        $region17: #{tpu_custom_call.1} parent=15 // pred_check
          %p114 = pneg %p37
        $region18: #{tpu_custom_call.1} parent=15 // pred_check_branch
          %116 = sbr.rel (%p114) target = $region20
        $region19: #{tpu_custom_call.1} parent=15 // pred_region
          %s117 = sand.u32 %s27, 1
          %s118 = scalar_lea.sflag [#allocation3], %s117
          %s119 = sand.u32 %s27, 1
          %s120 = smul.addr %s119, 16
          %s121 = scalar_lea.vmem [#allocation2], %s120
          %123 = vsyncadd %s118, 0
          %s124 = smul.addr %s17, 8
          %s125 = scalar_lea.hbm %s0, %s124
          %s126 = sshll.u32 %s125, 4
          %s127 = int_to_ptr.hbm [resolvable:$true] %s126
          %s128 = sshll.u32 %s121, 4
          %s129 = int_to_ptr.vmem [resolvable:$true] %s128
          %134 = dma.hbm_to_vmem [thread:$0]  %s127, 256, %s129, %s118, 256, 128, 8
        $region20: #{tpu_custom_call.1} parent=15 // pred_fallthru
          _
        // Predicated region
        $region21: #{tpu_custom_call.1} parent=15 // pred_check
          %p135 = pneg %p63
        $region22: #{tpu_custom_call.1} parent=15 // pred_check_branch
          %137 = sbr.rel (%p135) target = $region24
        $region23: #{tpu_custom_call.1} parent=15 // pred_region
          %s138 = sand.u32 %s53, 1
          %s139 = scalar_lea.sflag [#allocation6], %s138
          %s140 = sand.u32 %s53, 1
          %s141 = smul.addr %s140, 8
          %s142 = scalar_lea.vmem [#allocation5], %s141
          %144 = vsyncadd %s139, 0
          %s145 = smul.addr %s17, 8
          %s146 = scalar_lea.hbm %s1, %s145
          %s148 = sshll.u32 %s146, 4
          %s149 = int_to_ptr.hbm [resolvable:$true] %s148
          %s150 = sshll.u32 %s142, 4
          %s151 = int_to_ptr.vmem [resolvable:$true] %s150
          %153 = dma.hbm_to_vmem [thread:$0]  %s149, 128, %s151, %s139
        $region24: #{tpu_custom_call.1} parent=15 // pred_fallthru
          _
      $region16: #{tpu_custom_call.1} parent=5 // pred_fallthru
        _
      %p154 = scmp.le.s32.totalorder 1, %s17
      %p155 = scmp.lt.s32.totalorder %s17, 3
      %p156 = pnand %p154, %p155
      %p157 = pneg %p156
      // Predicated region
      $region25: #{tpu_custom_call.1} parent=5 // pred_check
        _
      $region26: #{tpu_custom_call.1} parent=5 // pred_check_branch
        %159 = sbr.rel (%p156) target = $region28
      $region27: #{tpu_custom_call.1} parent=5 // pred_region
        %s160 = ssub.s32 %s17, 1
        %s161 = sand.u32 %s30, 1
        %s162 = scalar_lea.sflag [#allocation3], %s161
        %s163 = sand.u32 %s30, 1
        %s164 = smul.addr %s163, 16
        %s165 = scalar_lea.vmem [#allocation2], %s164
        // Predicated region
        $region29: #{tpu_custom_call.1} parent=27 // pred_check
          %p166 = pneg %p43
        $region30: #{tpu_custom_call.1} parent=27 // pred_check_branch
          %168 = sbr.rel (%p166) target = $region32
        $region31: #{tpu_custom_call.1} parent=27 // pred_region
          %170 = dma.done %s162, 256
        $region32: #{tpu_custom_call.1} parent=27 // pred_fallthru
          _
        %s171 = sand.u32 %s56, 1
        %s172 = scalar_lea.sflag [#allocation6], %s171
        %s173 = sand.u32 %s56, 1
        %s174 = smul.addr %s173, 8
        %s175 = scalar_lea.vmem [#allocation5], %s174
        // Predicated region
        $region33: #{tpu_custom_call.1} parent=27 // pred_check
          %p176 = pneg %p69
        $region34: #{tpu_custom_call.1} parent=27 // pred_check_branch
          %178 = sbr.rel (%p176) target = $region36
        $region35: #{tpu_custom_call.1} parent=27 // pred_region
          %180 = dma.done %s172, 128
        $region36: #{tpu_custom_call.1} parent=27 // pred_fallthru
          _
        %s181 = sand.u32 %s30, 1
        %s182 = scalar_lea.sflag [#allocation3], %s181
        %s183 = sand.u32 %s30, 1
        %s184 = smul.addr %s183, 16
        %s185 = scalar_lea.vmem [#allocation2], %s184
        %p186 = pneg %p43
        %p187 = pneg %p40
        %s188 = sand.u32 %s56, 1
        %s189 = scalar_lea.sflag [#allocation6], %s188
        %s190 = sand.u32 %s56, 1
        %s191 = smul.addr %s190, 8
        %s192 = scalar_lea.vmem [#allocation5], %s191
        %p193 = pneg %p69
        %p194 = pneg %p66
        %p195 = pneg %p95
        %p196 = pneg %p92
        %s197 = sand.u32 %s82, 1
        %s198 = scalar_lea.sflag [#allocation4], %s197
        %s199 = sand.u32 %s82, 1
        %s200 = smul.addr %s199, 8
        %s201 = scalar_lea.vmem [#allocation7], %s200
        %v202 = vld [vmem:[%s165] sm:$0xff]
        %v203 = vld [vmem:[%s165 + $0x8] sm:$0xff]
        %v204 = vld [vmem:[%s175] sm:$0xff]
        %v205 = vmax.f32 %v202, %v203
        %v206 = vsub.f32 %v202, %v205
        %v207 = vsub.f32 %v203, %v205
        %v208 = vmul.f32 %v206, 1.442695
        %v209 = vpow.pop %v208
        %v210 = vmul.f32 %v207, 1.442695
        %v211 = vpow.pop %v210
        %v212 = vadd.f32 %v209, %v211
        %v213 = vrcp.pop %v212
        %v214 = vmul.f32 %v212, %v213
        %v215 = vsub.f32 1.0, %v214
        %v216 = vmul.f32 %v213, %v215
        %v217 = vadd.f32 %v213, %v216
        %vm218 = vweird.f32 %v212
        %vm219 = vweird.f32 %v213
        %vm220 = vmor %vm218, %vm219
        %v221 = vsel %vm220, %v213, %v217
        %v222 = vand.u32 2147483647, %v212
        %vm223 = vcmp.eq.f32.partialorder %v222, 8.507059e+37
        %v224 = vand.u32 %v212, 2147483648
        %v225 = vor.u32 1.1754944e-38, %v224
        %v226 = vsel %vm223, %v225, %v221
        %v227 = vlog2.pop %v212
        %v228 = vmul.f32 %v227, 0.6931472
        %v229 = vadd.f32 %v206, %v207
        %vm230 = vcmp.eq.s32.totalorder %v204, 0
        %v231 = vsel %vm230, 1, 0
        %v232 = vcvt.s32.f32 %v231
        %v233 = vmul.f32 %v209, %v226
        %v234 = vmul.f32 %v233, %v232
        %v235 = vrot.slane %v234, 4
        %v236 = vadd.f32 %v234, %v235
        %v237 = vrot.slane %v236, 2
        %v238 = vadd.f32 %v236, %v237
        %v239 = vrot.slane %v238, 1
        %v240 = vadd.f32 %v238, %v239
        %v241 = vrot.slane %v233, 4
        %v242 = vadd.f32 %v233, %v241
        %v243 = vrot.slane %v242, 2
        %v244 = vadd.f32 %v242, %v243
        %v245 = vrot.slane %v244, 1
        %v246 = vadd.f32 %v244, %v245
        %v247 = vrot.slane %v232, 4
        %v248 = vadd.f32 %v232, %v247
        %v249 = vrot.slane %v248, 2
        %v250 = vadd.f32 %v248, %v249
        %v251 = vrot.slane %v250, 1
        %v252 = vadd.f32 %v250, %v251
        %v253 = vsel %vm230, %v206, 0.0
        %v254 = vadd.f32 %v253, 0.0
        %vm255 = vcmp.eq.s32.totalorder %v204, 1
        %v256 = vsel %vm255, 1, 0
        %v257 = vcvt.s32.f32 %v256
        %v258 = vmul.f32 %v211, %v226
        %v259 = vmul.f32 %v258, %v257
        %v260 = vrot.slane %v259, 4
        %v261 = vadd.f32 %v259, %v260
        %v262 = vrot.slane %v261, 2
        %v263 = vadd.f32 %v261, %v262
        %v264 = vrot.slane %v263, 1
        %v265 = vadd.f32 %v263, %v264
        %v266 = vrot.slane %v258, 4
        %v267 = vadd.f32 %v258, %v266
        %v268 = vrot.slane %v267, 2
        %v269 = vadd.f32 %v267, %v268
        %v270 = vrot.slane %v269, 1
        %v271 = vadd.f32 %v269, %v270
        %v272 = vrot.slane %v257, 4
        %v273 = vadd.f32 %v257, %v272
        %v274 = vrot.slane %v273, 2
        %v275 = vadd.f32 %v273, %v274
        %v276 = vrot.slane %v275, 1
        %v277 = vadd.f32 %v275, %v276
        %v278 = vsel %vm255, %v207, 0.0
        %v279 = vadd.f32 %v254, %v278
        %v280 = vsub.f32 %v228, %v279
        %v281 = vmul.f32 %v228, 2.0
        %v282 = vsub.f32 %v281, %v229
        %v283 = vrot.slane %v280, 4
        %v284 = vadd.f32 %v280, %v283
        %v285 = vrot.slane %v284, 2
        %v286 = vadd.f32 %v284, %v285
        %v287 = vrot.slane %v286, 1
        %v288 = vadd.f32 %v286, %v287
        %v289 = vrot.slane %v282, 4
        %v290 = vadd.f32 %v282, %v289
        %v291 = vrot.slane %v290, 2
        %v292 = vadd.f32 %v290, %v291
        %v293 = vrot.slane %v292, 1
        %v294 = vadd.f32 %v292, %v293
        %vm295 = vcmask 1040384
        %v296 = vsel %vm295, %v240, %v265
        %vm297 = vcmask 1041408
        %v298 = vsel %vm297, %v296, %v246
        %vm299 = vcmask 1042432
        %v300 = vsel %vm299, %v298, %v271
        %vm301 = vcmask 1043456
        %v302 = vsel %vm301, %v300, %v252
        %vm303 = vcmask 1044480
        %v304 = vsel %vm303, %v302, %v277
        %vm305 = vcmask 1045504
        %v306 = vsel %vm305, %v304, %v288
        %vm307 = vcmask 1046528
        %v308 = vsel %vm307, %v306, %v294
        %309 = vst [vmem:[%s201] sm:$0xff] %v308
        %s310 = sand.u32 %s82, 1
        %s311 = scalar_lea.sflag [#allocation4], %s310
        %s312 = sand.u32 %s82, 1
        %s313 = smul.addr %s312, 8
        %s314 = scalar_lea.vmem [#allocation7], %s313
        // Predicated region
        $region37: #{tpu_custom_call.1} parent=27 // pred_check
          %p315 = pneg %p92
        $region38: #{tpu_custom_call.1} parent=27 // pred_check_branch
          %317 = sbr.rel (%p315) target = $region40
        $region39: #{tpu_custom_call.1} parent=27 // pred_region
          %319 = vsyncadd %s311, 0
          %s320 = smul.addr %s22, 8
          %s321 = scalar_lea.hbm %s2, %s320
          %s323 = sshll.u32 %s314, 4
          %s324 = int_to_ptr.vmem [resolvable:$true] %s323
          %s325 = sshll.u32 %s321, 4
          %s326 = int_to_ptr.hbm [resolvable:$true] %s325
          %328 = dma.vmem_to_hbm [thread:$0]  %s324, 128, %s326, %s311
        $region40: #{tpu_custom_call.1} parent=27 // pred_fallthru
          _
      $region28: #{tpu_custom_call.1} parent=5 // pred_fallthru
        _
      %p329 = scmp.le.s32.totalorder 2, %s17
      // Predicated region
      $region41: #{tpu_custom_call.1} parent=5 // pred_check
        %p330 = pneg %p329
      $region42: #{tpu_custom_call.1} parent=5 // pred_check_branch
        %332 = sbr.rel (%p330) target = $region44
      $region43: #{tpu_custom_call.1} parent=5 // pred_region
        %s333 = ssub.s32 %s17, 2
        // Predicated region
        $region45: #{tpu_custom_call.1} parent=43 // pred_check
          %p334 = pneg %p98
        $region46: #{tpu_custom_call.1} parent=43 // pred_check_branch
          %336 = sbr.rel (%p334) target = $region48
        $region47: #{tpu_custom_call.1} parent=43 // pred_region
          %s337 = sand.u32 %s83, 1
          %s338 = scalar_lea.sflag [#allocation4], %s337
          %s339 = sand.u32 %s83, 1
          %s340 = smul.addr %s339, 8
          %s341 = scalar_lea.vmem [#allocation7], %s340
          %343 = dma.done %s338, 128
        $region48: #{tpu_custom_call.1} parent=43 // pred_fallthru
          _
      $region44: #{tpu_custom_call.1} parent=5 // pred_fallthru
        _
    $region6: #{tpu_custom_call.1} parent=1 // loop_footer
      %s21 = sadd.s32 1, %s17
    $region7: #{tpu_custom_call.1} parent=1 // loop_footer_branch
      %16 = sbr.rel target = $region3
    $region8: #{tpu_custom_call.1} parent=1 // loop_exit
      _
    %344 = vsyncpa [#allocation3], 1
    %s345 = scalar_lea.sflag [#allocation3], 1
    %346 = vsyncpa %s345, 1
    %347 = vsyncpa [#allocation6], 1
    %s348 = scalar_lea.sflag [#allocation6], 1
    %349 = vsyncpa %s348, 1
    %350 = vsyncpa [#allocation4], 1
    %s351 = scalar_lea.sflag [#allocation4], 1
    %352 = vsyncpa %s351, 1

</llo_original>
